<compile_context>
chip_gen: v7x
topology: tpu7x:2x2x1
jax: 0.10.0
libtpu: 0.0.40
codegen_flags: <defaults>
</compile_context>

<pallas_src>
import jax
import jax.numpy as jnp
from jax.experimental import pallas as pl
from jax.experimental.pallas import tpu as pltpu


def _make_kernel(batch, seq_len):
    """Build the kernel with static B, S baked in (ids are flattened to 1D)."""

    def rnn_fc_kernel(ids_ref, w_ih_t_ref, w_hh_t_ref, w_fc_t_ref, b_fc_ref,
                      out_ref):
        # ids_ref:    (B*S,) int32  char ids, scalar-prefetched into SMEM
        # w_ih_t_ref: (I, H)        RNN input->hidden weight, transposed (VMEM)
        # w_hh_t_ref: (H, H)        RNN hidden->hidden weight, transposed (VMEM)
        # w_fc_t_ref: (H, C)        final Linear weight, transposed (VMEM)
        # b_fc_ref:   (1, C)        final Linear bias (VMEM)
        # out_ref:    (B, C)        logits = fc(h_last)
        I, H = w_ih_t_ref.shape

        w_hh_t = w_hh_t_ref[...]          # (H, H), load once
        w_fc_t = w_fc_t_ref[...]          # (H, C), load once
        b_fc = b_fc_ref[...]              # (1, C), load once

        # Each batch row's recurrence is independent -> B fully-unrolled serial
        # chains the scheduler can interleave; hidden state lives in vregs.
        for b in range(batch):
            h = jnp.zeros((1, H), jnp.float32)
            for t in range(seq_len):
                idx = ids_ref[b * seq_len + t]
                # Dynamic sublane gather has no runtime OOB check; guard it.
                pl.debug_check(jnp.logical_and(idx >= 0, idx < I),
                               "char id out of range for W_ih^T row gather")
                # one_hot(x_t) @ W_ih^T  ==  gather row `char_id` of W_ih^T.
                acc = w_ih_t_ref[pl.ds(idx, 1), :]                  # (1, H)
                if t > 0:
                    # h @ W_hh^T as H VPU FMAs (no MXU latency on the serial
                    # dependence path).  h_0 == 0, so t == 0 skips this term.
                    for k in range(H):
                        acc = acc + h[:, k:k + 1] * w_hh_t[k:k + 1, :]
                h = jnp.tanh(acc)

            # Final Linear for this row, entirely on the VPU:
            #   logits = h @ W_fc^T + b_fc = sum_k h[k] * W_fc^T[k, :] + b_fc
            # Row retires independently as soon as its chain finishes.
            logits = b_fc
            for k in range(H):
                logits = logits + h[:, k:k + 1] * w_fc_t[k:k + 1, :]
            out_ref[pl.ds(b, 1), :] = logits

    return rnn_fc_kernel


def prepare_params(w_ih, w_hh, w_fc, b_fc):
    """One-time parameter prep (transposes/casts/reshape) hoisted out of the
    per-call path."""
    return (jnp.transpose(w_ih).astype(jnp.float32),       # (I, H)
            jnp.transpose(w_hh).astype(jnp.float32),        # (H, H)
            jnp.transpose(w_fc).astype(jnp.float32),        # (H, C)
            jnp.reshape(b_fc, (1, -1)).astype(jnp.float32)) # (1, C)


@jax.jit
def torch_rnn_forward(char_ids, w_ih_t, w_hh_t, w_fc_t, b_fc_row):
    """char_ids: (B, S) int32 character indices (argmax of the one-hot rows the
    PyTorch CharEncoder would produce).  Weights are the pre-transposed params
    from prepare_params().  Returns logits (B, C), matching TorchRNN.forward
    (hidden.squeeze(0) -> fc) applied per batch row."""
    B, S = char_ids.shape
    C = w_fc_t.shape[1]

    vmem = pl.BlockSpec(memory_space=pltpu.MemorySpace.VMEM)

    out = pl.pallas_call(
        _make_kernel(B, S),
        out_shape=jax.ShapeDtypeStruct((B, C), jnp.float32),
        grid_spec=pltpu.PrefetchScalarGridSpec(
            num_scalar_prefetch=1,           # flat char_ids -> SMEM
            grid=(),                         # single invocation; all data tiny
            in_specs=[vmem, vmem, vmem, vmem],
            out_specs=vmem,
        ),
    )(char_ids.reshape(B * S).astype(jnp.int32),
      w_ih_t, w_hh_t, w_fc_t, b_fc_row)
    return out


def reference_forward(char_ids, w_ih, w_hh, w_fc, b_fc):
    """Pure-JAX reference replicating nn.RNN(bias=False) + nn.Linear on the
    one-hot encoding of char_ids (exactly what the PyTorch module computes)."""
    B, S = char_ids.shape
    H, I = w_ih.shape
    x = jax.nn.one_hot(char_ids, I, dtype=jnp.float32)   # (B, S, I)
    h = jnp.zeros((B, H), jnp.float32)
    for t in range(S):
        h = jnp.tanh(x[:, t, :] @ w_ih.T + h @ w_hh.T)
    return h @ w_fc.T + b_fc


if __name__ == "__main__":
    # Module constants from the source: 26 chars, hidden=4, num_classes=5 (max_length).
    input_size = 26
    hidden_size = 4
    num_classes = 5
    batch = 2
    seq_len = 5   # strings of length max_length

    key = jax.random.PRNGKey(0)
    k_x, k_ih, k_hh, k_fc, k_b = jax.random.split(key, 5)

    # Deterministic synthetic "strings": character indices, (B, S).
    char_ids = jax.random.randint(k_x, (batch, seq_len), 0, input_size,
                                  dtype=jnp.int32)

    # Deterministic parameter init (PyTorch-style U(-1/sqrt(H), 1/sqrt(H)) scale).
    bound = 1.0 / jnp.sqrt(jnp.float32(hidden_size))
    w_ih = jax.random.uniform(k_ih, (hidden_size, input_size),
                              jnp.float32, -bound, bound)   # weight_ih_l0
    w_hh = jax.random.uniform(k_hh, (hidden_size, hidden_size),
                              jnp.float32, -bound, bound)   # weight_hh_l0
    w_fc = jax.random.uniform(k_fc, (num_classes, hidden_size),
                              jnp.float32, -bound, bound)   # fc.weight
    b_fc = jax.random.uniform(k_b, (num_classes,),
                              jnp.float32, -bound, bound)   # fc.bias

    # One-time param prep (hoisted out of the per-call path), then one jitted
    # dispatch per forward call.
    params = prepare_params(w_ih, w_hh, w_fc, b_fc)
    params = jax.block_until_ready(params)

    out = torch_rnn_forward(char_ids, *params)
    out = jax.block_until_ready(out)

    ref = reference_forward(char_ids, w_ih, w_hh, w_fc, b_fc)
    assert out.shape == (batch, num_classes)
    assert jnp.allclose(out, ref, atol=1e-5, rtol=1e-5), (out, ref)

    print("KERNEL_OK")
</pallas_src>

<mosaic_0001>
module attributes {stable_mosaic.version = 11 : i64} {
  func.func @rnn_fc_kernel(%arg0: memref<10xi32, #tpu.memory_space<smem>>, %arg1: memref<26x4xf32, #tpu.memory_space<vmem>>, %arg2: memref<4x4xf32, #tpu.memory_space<vmem>>, %arg3: memref<4x5xf32, #tpu.memory_space<vmem>>, %arg4: memref<1x5xf32, #tpu.memory_space<vmem>>, %arg5: memref<2x5xf32, #tpu.memory_space<vmem>>) attributes {dimension_semantics = [], scalar_prefetch = 1 : i64, scratch_operands = 0 : i64, tpu.core_type = #tpu.core_type<tc>} {
    %c0 = arith.constant 0 : index
    %c0_0 = arith.constant 0 : index
    %0 = vector.load %arg2[%c0, %c0_0] : memref<4x4xf32, #tpu.memory_space<vmem>>, vector<4x4xf32>
    %c0_1 = arith.constant 0 : index
    %c0_2 = arith.constant 0 : index
    %1 = vector.load %arg3[%c0_1, %c0_2] : memref<4x5xf32, #tpu.memory_space<vmem>>, vector<4x5xf32>
    %c0_3 = arith.constant 0 : index
    %c0_4 = arith.constant 0 : index
    %2 = vector.load %arg4[%c0_3, %c0_4] : memref<1x5xf32, #tpu.memory_space<vmem>>, vector<1x5xf32>
    %c0_5 = arith.constant 0 : index
    %3 = memref.load %arg0[%c0_5] : memref<10xi32, #tpu.memory_space<smem>>
    %c0_i32 = arith.constant 0 : i32
    %4 = arith.cmpi sge, %3, %c0_i32 : i32
    %c26_i32 = arith.constant 26 : i32
    %5 = arith.cmpi slt, %3, %c26_i32 : i32
    %6 = arith.andi %4, %5 : i1
    %true = arith.constant true
    %7 = arith.xori %6, %true : i1
    %false = arith.constant false
    %8 = arith.ori %false, %7 : i1
    %false_6 = arith.constant false
    %c1_i32 = arith.constant 1 : i32
    %c-1_i32 = arith.constant -1 : i32
    %9 = arith.select %false_6, %c-1_i32, %c1_i32 : i32
    %10 = arith.index_cast %3 : i32 to index
    %c0_7 = arith.constant 0 : index
    %11 = vector.load %arg1[%10, %c0_7] : memref<26x4xf32, #tpu.memory_space<vmem>>, vector<1x4xf32>
    %12 = math.tanh %11 : vector<1x4xf32>
    %c1 = arith.constant 1 : index
    %13 = memref.load %arg0[%c1] : memref<10xi32, #tpu.memory_space<smem>>
    %c0_i32_8 = arith.constant 0 : i32
    %14 = arith.cmpi sge, %13, %c0_i32_8 : i32
    %c26_i32_9 = arith.constant 26 : i32
    %15 = arith.cmpi slt, %13, %c26_i32_9 : i32
    %16 = arith.andi %14, %15 : i1
    %true_10 = arith.constant true
    %17 = arith.xori %16, %true_10 : i1
    %false_11 = arith.constant false
    %18 = arith.ori %false_11, %17 : i1
    %false_12 = arith.constant false
    %c2_i32 = arith.constant 2 : i32
    %c-1_i32_13 = arith.constant -1 : i32
    %19 = arith.select %false_12, %c-1_i32_13, %c2_i32 : i32
    %20 = arith.index_cast %13 : i32 to index
    %c0_14 = arith.constant 0 : index
    %21 = vector.load %arg1[%20, %c0_14] : memref<26x4xf32, #tpu.memory_space<vmem>>, vector<1x4xf32>
    %22 = vector.extract_strided_slice %12 {offsets = [0, 0], sizes = [1, 1], strides = [1, 1]} : vector<1x4xf32> to vector<1x1xf32>
    %23 = vector.extract_strided_slice %0 {offsets = [0, 0], sizes = [1, 4], strides = [1, 1]} : vector<4x4xf32> to vector<1x4xf32>
    %24 = vector.broadcast %22 : vector<1x1xf32> to vector<1x4xf32>
    %25 = arith.mulf %24, %23 : vector<1x4xf32>
    %26 = arith.addf %21, %25 : vector<1x4xf32>
    %27 = vector.extract_strided_slice %12 {offsets = [0, 1], sizes = [1, 1], strides = [1, 1]} : vector<1x4xf32> to vector<1x1xf32>
    %28 = vector.extract_strided_slice %0 {offsets = [1, 0], sizes = [1, 4], strides = [1, 1]} : vector<4x4xf32> to vector<1x4xf32>
    %29 = vector.broadcast %27 : vector<1x1xf32> to vector<1x4xf32>
    %30 = arith.mulf %29, %28 : vector<1x4xf32>
    %31 = arith.addf %26, %30 : vector<1x4xf32>
    %32 = vector.extract_strided_slice %12 {offsets = [0, 2], sizes = [1, 1], strides = [1, 1]} : vector<1x4xf32> to vector<1x1xf32>
    %33 = vector.extract_strided_slice %0 {offsets = [2, 0], sizes = [1, 4], strides = [1, 1]} : vector<4x4xf32> to vector<1x4xf32>
    %34 = vector.broadcast %32 : vector<1x1xf32> to vector<1x4xf32>
    %35 = arith.mulf %34, %33 : vector<1x4xf32>
    %36 = arith.addf %31, %35 : vector<1x4xf32>
    %37 = vector.extract_strided_slice %12 {offsets = [0, 3], sizes = [1, 1], strides = [1, 1]} : vector<1x4xf32> to vector<1x1xf32>
    %38 = vector.extract_strided_slice %0 {offsets = [3, 0], sizes = [1, 4], strides = [1, 1]} : vector<4x4xf32> to vector<1x4xf32>
    %39 = vector.broadcast %37 : vector<1x1xf32> to vector<1x4xf32>
    %40 = arith.mulf %39, %38 : vector<1x4xf32>
    %41 = arith.addf %36, %40 : vector<1x4xf32>
    %42 = math.tanh %41 : vector<1x4xf32>
    %c2 = arith.constant 2 : index
    %43 = memref.load %arg0[%c2] : memref<10xi32, #tpu.memory_space<smem>>
    %c0_i32_15 = arith.constant 0 : i32
    %44 = arith.cmpi sge, %43, %c0_i32_15 : i32
    %c26_i32_16 = arith.constant 26 : i32
    %45 = arith.cmpi slt, %43, %c26_i32_16 : i32
    %46 = arith.andi %44, %45 : i1
    %true_17 = arith.constant true
    %47 = arith.xori %46, %true_17 : i1
    %false_18 = arith.constant false
    %48 = arith.ori %false_18, %47 : i1
    %false_19 = arith.constant false
    %c3_i32 = arith.constant 3 : i32
    %c-1_i32_20 = arith.constant -1 : i32
    %49 = arith.select %false_19, %c-1_i32_20, %c3_i32 : i32
    %50 = arith.index_cast %43 : i32 to index
    %c0_21 = arith.constant 0 : index
    %51 = vector.load %arg1[%50, %c0_21] : memref<26x4xf32, #tpu.memory_space<vmem>>, vector<1x4xf32>
    %52 = vector.extract_strided_slice %42 {offsets = [0, 0], sizes = [1, 1], strides = [1, 1]} : vector<1x4xf32> to vector<1x1xf32>
    %53 = vector.extract_strided_slice %0 {offsets = [0, 0], sizes = [1, 4], strides = [1, 1]} : vector<4x4xf32> to vector<1x4xf32>
    %54 = vector.broadcast %52 : vector<1x1xf32> to vector<1x4xf32>
    %55 = arith.mulf %54, %53 : vector<1x4xf32>
    %56 = arith.addf %51, %55 : vector<1x4xf32>
    %57 = vector.extract_strided_slice %42 {offsets = [0, 1], sizes = [1, 1], strides = [1, 1]} : vector<1x4xf32> to vector<1x1xf32>
    %58 = vector.extract_strided_slice %0 {offsets = [1, 0], sizes = [1, 4], strides = [1, 1]} : vector<4x4xf32> to vector<1x4xf32>
    %59 = vector.broadcast %57 : vector<1x1xf32> to vector<1x4xf32>
    %60 = arith.mulf %59, %58 : vector<1x4xf32>
    %61 = arith.addf %56, %60 : vector<1x4xf32>
    %62 = vector.extract_strided_slice %42 {offsets = [0, 2], sizes = [1, 1], strides = [1, 1]} : vector<1x4xf32> to vector<1x1xf32>
    %63 = vector.extract_strided_slice %0 {offsets = [2, 0], sizes = [1, 4], strides = [1, 1]} : vector<4x4xf32> to vector<1x4xf32>
    %64 = vector.broadcast %62 : vector<1x1xf32> to vector<1x4xf32>
    %65 = arith.mulf %64, %63 : vector<1x4xf32>
    %66 = arith.addf %61, %65 : vector<1x4xf32>
    %67 = vector.extract_strided_slice %42 {offsets = [0, 3], sizes = [1, 1], strides = [1, 1]} : vector<1x4xf32> to vector<1x1xf32>
    %68 = vector.extract_strided_slice %0 {offsets = [3, 0], sizes = [1, 4], strides = [1, 1]} : vector<4x4xf32> to vector<1x4xf32>
    %69 = vector.broadcast %67 : vector<1x1xf32> to vector<1x4xf32>
    %70 = arith.mulf %69, %68 : vector<1x4xf32>
    %71 = arith.addf %66, %70 : vector<1x4xf32>
    %72 = math.tanh %71 : vector<1x4xf32>
    %c3 = arith.constant 3 : index
    %73 = memref.load %arg0[%c3] : memref<10xi32, #tpu.memory_space<smem>>
    %c0_i32_22 = arith.constant 0 : i32
    %74 = arith.cmpi sge, %73, %c0_i32_22 : i32
    %c26_i32_23 = arith.constant 26 : i32
    %75 = arith.cmpi slt, %73, %c26_i32_23 : i32
    %76 = arith.andi %74, %75 : i1
    %true_24 = arith.constant true
    %77 = arith.xori %76, %true_24 : i1
    %false_25 = arith.constant false
    %78 = arith.ori %false_25, %77 : i1
    %false_26 = arith.constant false
    %c4_i32 = arith.constant 4 : i32
    %c-1_i32_27 = arith.constant -1 : i32
    %79 = arith.select %false_26, %c-1_i32_27, %c4_i32 : i32
    %80 = arith.index_cast %73 : i32 to index
    %c0_28 = arith.constant 0 : index
    %81 = vector.load %arg1[%80, %c0_28] : memref<26x4xf32, #tpu.memory_space<vmem>>, vector<1x4xf32>
    %82 = vector.extract_strided_slice %72 {offsets = [0, 0], sizes = [1, 1], strides = [1, 1]} : vector<1x4xf32> to vector<1x1xf32>
    %83 = vector.extract_strided_slice %0 {offsets = [0, 0], sizes = [1, 4], strides = [1, 1]} : vector<4x4xf32> to vector<1x4xf32>
    %84 = vector.broadcast %82 : vector<1x1xf32> to vector<1x4xf32>
    %85 = arith.mulf %84, %83 : vector<1x4xf32>
    %86 = arith.addf %81, %85 : vector<1x4xf32>
    %87 = vector.extract_strided_slice %72 {offsets = [0, 1], sizes = [1, 1], strides = [1, 1]} : vector<1x4xf32> to vector<1x1xf32>
    %88 = vector.extract_strided_slice %0 {offsets = [1, 0], sizes = [1, 4], strides = [1, 1]} : vector<4x4xf32> to vector<1x4xf32>
    %89 = vector.broadcast %87 : vector<1x1xf32> to vector<1x4xf32>
    %90 = arith.mulf %89, %88 : vector<1x4xf32>
    %91 = arith.addf %86, %90 : vector<1x4xf32>
    %92 = vector.extract_strided_slice %72 {offsets = [0, 2], sizes = [1, 1], strides = [1, 1]} : vector<1x4xf32> to vector<1x1xf32>
    %93 = vector.extract_strided_slice %0 {offsets = [2, 0], sizes = [1, 4], strides = [1, 1]} : vector<4x4xf32> to vector<1x4xf32>
    %94 = vector.broadcast %92 : vector<1x1xf32> to vector<1x4xf32>
    %95 = arith.mulf %94, %93 : vector<1x4xf32>
    %96 = arith.addf %91, %95 : vector<1x4xf32>
    %97 = vector.extract_strided_slice %72 {offsets = [0, 3], sizes = [1, 1], strides = [1, 1]} : vector<1x4xf32> to vector<1x1xf32>
    %98 = vector.extract_strided_slice %0 {offsets = [3, 0], sizes = [1, 4], strides = [1, 1]} : vector<4x4xf32> to vector<1x4xf32>
    %99 = vector.broadcast %97 : vector<1x1xf32> to vector<1x4xf32>
    %100 = arith.mulf %99, %98 : vector<1x4xf32>
    %101 = arith.addf %96, %100 : vector<1x4xf32>
    %102 = math.tanh %101 : vector<1x4xf32>
    %c4 = arith.constant 4 : index
    %103 = memref.load %arg0[%c4] : memref<10xi32, #tpu.memory_space<smem>>
    %c0_i32_29 = arith.constant 0 : i32
    %104 = arith.cmpi sge, %103, %c0_i32_29 : i32
    %c26_i32_30 = arith.constant 26 : i32
    %105 = arith.cmpi slt, %103, %c26_i32_30 : i32
    %106 = arith.andi %104, %105 : i1
    %true_31 = arith.constant true
    %107 = arith.xori %106, %true_31 : i1
    %false_32 = arith.constant false
    %108 = arith.ori %false_32, %107 : i1
    %false_33 = arith.constant false
    %c5_i32 = arith.constant 5 : i32
    %c-1_i32_34 = arith.constant -1 : i32
    %109 = arith.select %false_33, %c-1_i32_34, %c5_i32 : i32
    %110 = arith.index_cast %103 : i32 to index
    %c0_35 = arith.constant 0 : index
    %111 = vector.load %arg1[%110, %c0_35] : memref<26x4xf32, #tpu.memory_space<vmem>>, vector<1x4xf32>
    %112 = vector.extract_strided_slice %102 {offsets = [0, 0], sizes = [1, 1], strides = [1, 1]} : vector<1x4xf32> to vector<1x1xf32>
    %113 = vector.extract_strided_slice %0 {offsets = [0, 0], sizes = [1, 4], strides = [1, 1]} : vector<4x4xf32> to vector<1x4xf32>
    %114 = vector.broadcast %112 : vector<1x1xf32> to vector<1x4xf32>
    %115 = arith.mulf %114, %113 : vector<1x4xf32>
    %116 = arith.addf %111, %115 : vector<1x4xf32>
    %117 = vector.extract_strided_slice %102 {offsets = [0, 1], sizes = [1, 1], strides = [1, 1]} : vector<1x4xf32> to vector<1x1xf32>
    %118 = vector.extract_strided_slice %0 {offsets = [1, 0], sizes = [1, 4], strides = [1, 1]} : vector<4x4xf32> to vector<1x4xf32>
    %119 = vector.broadcast %117 : vector<1x1xf32> to vector<1x4xf32>
    %120 = arith.mulf %119, %118 : vector<1x4xf32>
    %121 = arith.addf %116, %120 : vector<1x4xf32>
    %122 = vector.extract_strided_slice %102 {offsets = [0, 2], sizes = [1, 1], strides = [1, 1]} : vector<1x4xf32> to vector<1x1xf32>
    %123 = vector.extract_strided_slice %0 {offsets = [2, 0], sizes = [1, 4], strides = [1, 1]} : vector<4x4xf32> to vector<1x4xf32>
    %124 = vector.broadcast %122 : vector<1x1xf32> to vector<1x4xf32>
    %125 = arith.mulf %124, %123 : vector<1x4xf32>
    %126 = arith.addf %121, %125 : vector<1x4xf32>
    %127 = vector.extract_strided_slice %102 {offsets = [0, 3], sizes = [1, 1], strides = [1, 1]} : vector<1x4xf32> to vector<1x1xf32>
    %128 = vector.extract_strided_slice %0 {offsets = [3, 0], sizes = [1, 4], strides = [1, 1]} : vector<4x4xf32> to vector<1x4xf32>
    %129 = vector.broadcast %127 : vector<1x1xf32> to vector<1x4xf32>
    %130 = arith.mulf %129, %128 : vector<1x4xf32>
    %131 = arith.addf %126, %130 : vector<1x4xf32>
    %132 = math.tanh %131 : vector<1x4xf32>
    %133 = vector.extract_strided_slice %132 {offsets = [0, 0], sizes = [1, 1], strides = [1, 1]} : vector<1x4xf32> to vector<1x1xf32>
    %134 = vector.extract_strided_slice %1 {offsets = [0, 0], sizes = [1, 5], strides = [1, 1]} : vector<4x5xf32> to vector<1x5xf32>
    %135 = vector.broadcast %133 : vector<1x1xf32> to vector<1x5xf32>
    %136 = arith.mulf %135, %134 : vector<1x5xf32>
    %137 = arith.addf %2, %136 : vector<1x5xf32>
    %138 = vector.extract_strided_slice %132 {offsets = [0, 1], sizes = [1, 1], strides = [1, 1]} : vector<1x4xf32> to vector<1x1xf32>
    %139 = vector.extract_strided_slice %1 {offsets = [1, 0], sizes = [1, 5], strides = [1, 1]} : vector<4x5xf32> to vector<1x5xf32>
    %140 = vector.broadcast %138 : vector<1x1xf32> to vector<1x5xf32>
    %141 = arith.mulf %140, %139 : vector<1x5xf32>
    %142 = arith.addf %137, %141 : vector<1x5xf32>
    %143 = vector.extract_strided_slice %132 {offsets = [0, 2], sizes = [1, 1], strides = [1, 1]} : vector<1x4xf32> to vector<1x1xf32>
    %144 = vector.extract_strided_slice %1 {offsets = [2, 0], sizes = [1, 5], strides = [1, 1]} : vector<4x5xf32> to vector<1x5xf32>
    %145 = vector.broadcast %143 : vector<1x1xf32> to vector<1x5xf32>
    %146 = arith.mulf %145, %144 : vector<1x5xf32>
    %147 = arith.addf %142, %146 : vector<1x5xf32>
    %148 = vector.extract_strided_slice %132 {offsets = [0, 3], sizes = [1, 1], strides = [1, 1]} : vector<1x4xf32> to vector<1x1xf32>
    %149 = vector.extract_strided_slice %1 {offsets = [3, 0], sizes = [1, 5], strides = [1, 1]} : vector<4x5xf32> to vector<1x5xf32>
    %150 = vector.broadcast %148 : vector<1x1xf32> to vector<1x5xf32>
    %151 = arith.mulf %150, %149 : vector<1x5xf32>
    %152 = arith.addf %147, %151 : vector<1x5xf32>
    %c0_36 = arith.constant 0 : index
    %c0_37 = arith.constant 0 : index
    %153 = vector.load %arg5[%c0_36, %c0_37] : memref<2x5xf32, #tpu.memory_space<vmem>>, vector<1x5xf32>
    tpu.vector_store %arg5[%c0_36, %c0_37], %152 {strides = array<i32>} : memref<2x5xf32, #tpu.memory_space<vmem>>, vector<1x5xf32>,
    %c5 = arith.constant 5 : index
    %154 = memref.load %arg0[%c5] : memref<10xi32, #tpu.memory_space<smem>>
    %c0_i32_38 = arith.constant 0 : i32
    %155 = arith.cmpi sge, %154, %c0_i32_38 : i32
    %c26_i32_39 = arith.constant 26 : i32
    %156 = arith.cmpi slt, %154, %c26_i32_39 : i32
    %157 = arith.andi %155, %156 : i1
    %true_40 = arith.constant true
    %158 = arith.xori %157, %true_40 : i1
    %false_41 = arith.constant false
    %159 = arith.ori %false_41, %158 : i1
    %false_42 = arith.constant false
    %c6_i32 = arith.constant 6 : i32
    %c-1_i32_43 = arith.constant -1 : i32
    %160 = arith.select %false_42, %c-1_i32_43, %c6_i32 : i32
    %161 = arith.index_cast %154 : i32 to index
    %c0_44 = arith.constant 0 : index
    %162 = vector.load %arg1[%161, %c0_44] : memref<26x4xf32, #tpu.memory_space<vmem>>, vector<1x4xf32>
    %163 = math.tanh %162 : vector<1x4xf32>
    %c6 = arith.constant 6 : index
    %164 = memref.load %arg0[%c6] : memref<10xi32, #tpu.memory_space<smem>>
    %c0_i32_45 = arith.constant 0 : i32
    %165 = arith.cmpi sge, %164, %c0_i32_45 : i32
    %c26_i32_46 = arith.constant 26 : i32
    %166 = arith.cmpi slt, %164, %c26_i32_46 : i32
    %167 = arith.andi %165, %166 : i1
    %true_47 = arith.constant true
    %168 = arith.xori %167, %true_47 : i1
    %false_48 = arith.constant false
    %169 = arith.ori %false_48, %168 : i1
    %false_49 = arith.constant false
    %c7_i32 = arith.constant 7 : i32
    %c-1_i32_50 = arith.constant -1 : i32
    %170 = arith.select %false_49, %c-1_i32_50, %c7_i32 : i32
    %171 = arith.index_cast %164 : i32 to index
    %c0_51 = arith.constant 0 : index
    %172 = vector.load %arg1[%171, %c0_51] : memref<26x4xf32, #tpu.memory_space<vmem>>, vector<1x4xf32>
    %173 = vector.extract_strided_slice %163 {offsets = [0, 0], sizes = [1, 1], strides = [1, 1]} : vector<1x4xf32> to vector<1x1xf32>
    %174 = vector.extract_strided_slice %0 {offsets = [0, 0], sizes = [1, 4], strides = [1, 1]} : vector<4x4xf32> to vector<1x4xf32>
    %175 = vector.broadcast %173 : vector<1x1xf32> to vector<1x4xf32>
    %176 = arith.mulf %175, %174 : vector<1x4xf32>
    %177 = arith.addf %172, %176 : vector<1x4xf32>
    %178 = vector.extract_strided_slice %163 {offsets = [0, 1], sizes = [1, 1], strides = [1, 1]} : vector<1x4xf32> to vector<1x1xf32>
    %179 = vector.extract_strided_slice %0 {offsets = [1, 0], sizes = [1, 4], strides = [1, 1]} : vector<4x4xf32> to vector<1x4xf32>
    %180 = vector.broadcast %178 : vector<1x1xf32> to vector<1x4xf32>
    %181 = arith.mulf %180, %179 : vector<1x4xf32>
    %182 = arith.addf %177, %181 : vector<1x4xf32>
    %183 = vector.extract_strided_slice %163 {offsets = [0, 2], sizes = [1, 1], strides = [1, 1]} : vector<1x4xf32> to vector<1x1xf32>
    %184 = vector.extract_strided_slice %0 {offsets = [2, 0], sizes = [1, 4], strides = [1, 1]} : vector<4x4xf32> to vector<1x4xf32>
    %185 = vector.broadcast %183 : vector<1x1xf32> to vector<1x4xf32>
    %186 = arith.mulf %185, %184 : vector<1x4xf32>
    %187 = arith.addf %182, %186 : vector<1x4xf32>
    %188 = vector.extract_strided_slice %163 {offsets = [0, 3], sizes = [1, 1], strides = [1, 1]} : vector<1x4xf32> to vector<1x1xf32>
    %189 = vector.extract_strided_slice %0 {offsets = [3, 0], sizes = [1, 4], strides = [1, 1]} : vector<4x4xf32> to vector<1x4xf32>
    %190 = vector.broadcast %188 : vector<1x1xf32> to vector<1x4xf32>
    %191 = arith.mulf %190, %189 : vector<1x4xf32>
    %192 = arith.addf %187, %191 : vector<1x4xf32>
    %193 = math.tanh %192 : vector<1x4xf32>
    %c7 = arith.constant 7 : index
    %194 = memref.load %arg0[%c7] : memref<10xi32, #tpu.memory_space<smem>>
    %c0_i32_52 = arith.constant 0 : i32
    %195 = arith.cmpi sge, %194, %c0_i32_52 : i32
    %c26_i32_53 = arith.constant 26 : i32
    %196 = arith.cmpi slt, %194, %c26_i32_53 : i32
    %197 = arith.andi %195, %196 : i1
    %true_54 = arith.constant true
    %198 = arith.xori %197, %true_54 : i1
    %false_55 = arith.constant false
    %199 = arith.ori %false_55, %198 : i1
    %false_56 = arith.constant false
    %c8_i32 = arith.constant 8 : i32
    %c-1_i32_57 = arith.constant -1 : i32
    %200 = arith.select %false_56, %c-1_i32_57, %c8_i32 : i32
    %201 = arith.index_cast %194 : i32 to index
    %c0_58 = arith.constant 0 : index
    %202 = vector.load %arg1[%201, %c0_58] : memref<26x4xf32, #tpu.memory_space<vmem>>, vector<1x4xf32>
    %203 = vector.extract_strided_slice %193 {offsets = [0, 0], sizes = [1, 1], strides = [1, 1]} : vector<1x4xf32> to vector<1x1xf32>
    %204 = vector.extract_strided_slice %0 {offsets = [0, 0], sizes = [1, 4], strides = [1, 1]} : vector<4x4xf32> to vector<1x4xf32>
    %205 = vector.broadcast %203 : vector<1x1xf32> to vector<1x4xf32>
    %206 = arith.mulf %205, %204 : vector<1x4xf32>
    %207 = arith.addf %202, %206 : vector<1x4xf32>
    %208 = vector.extract_strided_slice %193 {offsets = [0, 1], sizes = [1, 1], strides = [1, 1]} : vector<1x4xf32> to vector<1x1xf32>
    %209 = vector.extract_strided_slice %0 {offsets = [1, 0], sizes = [1, 4], strides = [1, 1]} : vector<4x4xf32> to vector<1x4xf32>
    %210 = vector.broadcast %208 : vector<1x1xf32> to vector<1x4xf32>
    %211 = arith.mulf %210, %209 : vector<1x4xf32>
    %212 = arith.addf %207, %211 : vector<1x4xf32>
    %213 = vector.extract_strided_slice %193 {offsets = [0, 2], sizes = [1, 1], strides = [1, 1]} : vector<1x4xf32> to vector<1x1xf32>
    %214 = vector.extract_strided_slice %0 {offsets = [2, 0], sizes = [1, 4], strides = [1, 1]} : vector<4x4xf32> to vector<1x4xf32>
    %215 = vector.broadcast %213 : vector<1x1xf32> to vector<1x4xf32>
    %216 = arith.mulf %215, %214 : vector<1x4xf32>
    %217 = arith.addf %212, %216 : vector<1x4xf32>
    %218 = vector.extract_strided_slice %193 {offsets = [0, 3], sizes = [1, 1], strides = [1, 1]} : vector<1x4xf32> to vector<1x1xf32>
    %219 = vector.extract_strided_slice %0 {offsets = [3, 0], sizes = [1, 4], strides = [1, 1]} : vector<4x4xf32> to vector<1x4xf32>
    %220 = vector.broadcast %218 : vector<1x1xf32> to vector<1x4xf32>
    %221 = arith.mulf %220, %219 : vector<1x4xf32>
    %222 = arith.addf %217, %221 : vector<1x4xf32>
    %223 = math.tanh %222 : vector<1x4xf32>
    %c8 = arith.constant 8 : index
    %224 = memref.load %arg0[%c8] : memref<10xi32, #tpu.memory_space<smem>>
    %c0_i32_59 = arith.constant 0 : i32
    %225 = arith.cmpi sge, %224, %c0_i32_59 : i32
    %c26_i32_60 = arith.constant 26 : i32
    %226 = arith.cmpi slt, %224, %c26_i32_60 : i32
    %227 = arith.andi %225, %226 : i1
    %true_61 = arith.constant true
    %228 = arith.xori %227, %true_61 : i1
    %false_62 = arith.constant false
    %229 = arith.ori %false_62, %228 : i1
    %false_63 = arith.constant false
    %c9_i32 = arith.constant 9 : i32
    %c-1_i32_64 = arith.constant -1 : i32
    %230 = arith.select %false_63, %c-1_i32_64, %c9_i32 : i32
    %231 = arith.index_cast %224 : i32 to index
    %c0_65 = arith.constant 0 : index
    %232 = vector.load %arg1[%231, %c0_65] : memref<26x4xf32, #tpu.memory_space<vmem>>, vector<1x4xf32>
    %233 = vector.extract_strided_slice %223 {offsets = [0, 0], sizes = [1, 1], strides = [1, 1]} : vector<1x4xf32> to vector<1x1xf32>
    %234 = vector.extract_strided_slice %0 {offsets = [0, 0], sizes = [1, 4], strides = [1, 1]} : vector<4x4xf32> to vector<1x4xf32>
    %235 = vector.broadcast %233 : vector<1x1xf32> to vector<1x4xf32>
    %236 = arith.mulf %235, %234 : vector<1x4xf32>
    %237 = arith.addf %232, %236 : vector<1x4xf32>
    %238 = vector.extract_strided_slice %223 {offsets = [0, 1], sizes = [1, 1], strides = [1, 1]} : vector<1x4xf32> to vector<1x1xf32>
    %239 = vector.extract_strided_slice %0 {offsets = [1, 0], sizes = [1, 4], strides = [1, 1]} : vector<4x4xf32> to vector<1x4xf32>
    %240 = vector.broadcast %238 : vector<1x1xf32> to vector<1x4xf32>
    %241 = arith.mulf %240, %239 : vector<1x4xf32>
    %242 = arith.addf %237, %241 : vector<1x4xf32>
    %243 = vector.extract_strided_slice %223 {offsets = [0, 2], sizes = [1, 1], strides = [1, 1]} : vector<1x4xf32> to vector<1x1xf32>
    %244 = vector.extract_strided_slice %0 {offsets = [2, 0], sizes = [1, 4], strides = [1, 1]} : vector<4x4xf32> to vector<1x4xf32>
    %245 = vector.broadcast %243 : vector<1x1xf32> to vector<1x4xf32>
    %246 = arith.mulf %245, %244 : vector<1x4xf32>
    %247 = arith.addf %242, %246 : vector<1x4xf32>
    %248 = vector.extract_strided_slice %223 {offsets = [0, 3], sizes = [1, 1], strides = [1, 1]} : vector<1x4xf32> to vector<1x1xf32>
    %249 = vector.extract_strided_slice %0 {offsets = [3, 0], sizes = [1, 4], strides = [1, 1]} : vector<4x4xf32> to vector<1x4xf32>
    %250 = vector.broadcast %248 : vector<1x1xf32> to vector<1x4xf32>
    %251 = arith.mulf %250, %249 : vector<1x4xf32>
    %252 = arith.addf %247, %251 : vector<1x4xf32>
    %253 = math.tanh %252 : vector<1x4xf32>
    %c9 = arith.constant 9 : index
    %254 = memref.load %arg0[%c9] : memref<10xi32, #tpu.memory_space<smem>>
    %c0_i32_66 = arith.constant 0 : i32
    %255 = arith.cmpi sge, %254, %c0_i32_66 : i32
    %c26_i32_67 = arith.constant 26 : i32
    %256 = arith.cmpi slt, %254, %c26_i32_67 : i32
    %257 = arith.andi %255, %256 : i1
    %true_68 = arith.constant true
    %258 = arith.xori %257, %true_68 : i1
    %false_69 = arith.constant false
    %259 = arith.ori %false_69, %258 : i1
    %false_70 = arith.constant false
    %c10_i32 = arith.constant 10 : i32
    %c-1_i32_71 = arith.constant -1 : i32
    %260 = arith.select %false_70, %c-1_i32_71, %c10_i32 : i32
    %261 = arith.index_cast %254 : i32 to index
    %c0_72 = arith.constant 0 : index
    %262 = vector.load %arg1[%261, %c0_72] : memref<26x4xf32, #tpu.memory_space<vmem>>, vector<1x4xf32>
    %263 = vector.extract_strided_slice %253 {offsets = [0, 0], sizes = [1, 1], strides = [1, 1]} : vector<1x4xf32> to vector<1x1xf32>
    %264 = vector.extract_strided_slice %0 {offsets = [0, 0], sizes = [1, 4], strides = [1, 1]} : vector<4x4xf32> to vector<1x4xf32>
    %265 = vector.broadcast %263 : vector<1x1xf32> to vector<1x4xf32>
    %266 = arith.mulf %265, %264 : vector<1x4xf32>
    %267 = arith.addf %262, %266 : vector<1x4xf32>
    %268 = vector.extract_strided_slice %253 {offsets = [0, 1], sizes = [1, 1], strides = [1, 1]} : vector<1x4xf32> to vector<1x1xf32>
    %269 = vector.extract_strided_slice %0 {offsets = [1, 0], sizes = [1, 4], strides = [1, 1]} : vector<4x4xf32> to vector<1x4xf32>
    %270 = vector.broadcast %268 : vector<1x1xf32> to vector<1x4xf32>
    %271 = arith.mulf %270, %269 : vector<1x4xf32>
    %272 = arith.addf %267, %271 : vector<1x4xf32>
    %273 = vector.extract_strided_slice %253 {offsets = [0, 2], sizes = [1, 1], strides = [1, 1]} : vector<1x4xf32> to vector<1x1xf32>
    %274 = vector.extract_strided_slice %0 {offsets = [2, 0], sizes = [1, 4], strides = [1, 1]} : vector<4x4xf32> to vector<1x4xf32>
    %275 = vector.broadcast %273 : vector<1x1xf32> to vector<1x4xf32>
    %276 = arith.mulf %275, %274 : vector<1x4xf32>
    %277 = arith.addf %272, %276 : vector<1x4xf32>
    %278 = vector.extract_strided_slice %253 {offsets = [0, 3], sizes = [1, 1], strides = [1, 1]} : vector<1x4xf32> to vector<1x1xf32>
    %279 = vector.extract_strided_slice %0 {offsets = [3, 0], sizes = [1, 4], strides = [1, 1]} : vector<4x4xf32> to vector<1x4xf32>
    %280 = vector.broadcast %278 : vector<1x1xf32> to vector<1x4xf32>
    %281 = arith.mulf %280, %279 : vector<1x4xf32>
    %282 = arith.addf %277, %281 : vector<1x4xf32>
    %283 = math.tanh %282 : vector<1x4xf32>
    %284 = vector.extract_strided_slice %283 {offsets = [0, 0], sizes = [1, 1], strides = [1, 1]} : vector<1x4xf32> to vector<1x1xf32>
    %285 = vector.extract_strided_slice %1 {offsets = [0, 0], sizes = [1, 5], strides = [1, 1]} : vector<4x5xf32> to vector<1x5xf32>
    %286 = vector.broadcast %284 : vector<1x1xf32> to vector<1x5xf32>
    %287 = arith.mulf %286, %285 : vector<1x5xf32>
    %288 = arith.addf %2, %287 : vector<1x5xf32>
    %289 = vector.extract_strided_slice %283 {offsets = [0, 1], sizes = [1, 1], strides = [1, 1]} : vector<1x4xf32> to vector<1x1xf32>
    %290 = vector.extract_strided_slice %1 {offsets = [1, 0], sizes = [1, 5], strides = [1, 1]} : vector<4x5xf32> to vector<1x5xf32>
    %291 = vector.broadcast %289 : vector<1x1xf32> to vector<1x5xf32>
    %292 = arith.mulf %291, %290 : vector<1x5xf32>
    %293 = arith.addf %288, %292 : vector<1x5xf32>
    %294 = vector.extract_strided_slice %283 {offsets = [0, 2], sizes = [1, 1], strides = [1, 1]} : vector<1x4xf32> to vector<1x1xf32>
    %295 = vector.extract_strided_slice %1 {offsets = [2, 0], sizes = [1, 5], strides = [1, 1]} : vector<4x5xf32> to vector<1x5xf32>
    %296 = vector.broadcast %294 : vector<1x1xf32> to vector<1x5xf32>
    %297 = arith.mulf %296, %295 : vector<1x5xf32>
    %298 = arith.addf %293, %297 : vector<1x5xf32>
    %299 = vector.extract_strided_slice %283 {offsets = [0, 3], sizes = [1, 1], strides = [1, 1]} : vector<1x4xf32> to vector<1x1xf32>
    %300 = vector.extract_strided_slice %1 {offsets = [3, 0], sizes = [1, 5], strides = [1, 1]} : vector<4x5xf32> to vector<1x5xf32>
    %301 = vector.broadcast %299 : vector<1x1xf32> to vector<1x5xf32>
    %302 = arith.mulf %301, %300 : vector<1x5xf32>
    %303 = arith.addf %298, %302 : vector<1x5xf32>
    %c1_73 = arith.constant 1 : index
    %c0_74 = arith.constant 0 : index
    %304 = vector.load %arg5[%c1_73, %c0_74] : memref<2x5xf32, #tpu.memory_space<vmem>>, vector<1x5xf32>
    tpu.vector_store %arg5[%c1_73, %c0_74], %303 {strides = array<i32>} : memref<2x5xf32, #tpu.memory_space<vmem>>, vector<1x5xf32>,
    return
  }
}

</mosaic_0001>

<llo_original>
// kernel: torch_rnn_forward.1
$region0: #{torch_rnn_forward.1}
  #allocation0 [shape = 'u32[]', space=smem, size = 0x4, offset = 0x4, fixed_abs, tag = 'smem constant byte address 0x4 - core index']
  #allocation1 [shape = 'u32[144,128]{1,0:T(1,128)}', space=vmem, size = 0x12000, scoped, tag = 'internal scratch']
  #allocation2 [shape = 's32[1]{0}', space=sflag, size = 0x4, scoped, tag = 'scoped memory for torch_rnn_forward.1']
  #allocation3 [shape = 'u8[512]{0}', space=smem, size = 0x200, scoped, tag = 'prefetched SMEM operand 0']
  %s0 = inlined_call_operand.vmem [shape: s32[10], index: 0, kind: input, shape index: {}]
  %s1 = inlined_call_operand.vmem [shape: f32[26,4], index: 1, kind: input, shape index: {}]
  %s2 = inlined_call_operand.vmem [shape: f32[4,4], index: 2, kind: input, shape index: {}]
  %s3 = inlined_call_operand.vmem [shape: f32[4,5], index: 3, kind: input, shape index: {}]
  %s4 = inlined_call_operand.vmem [shape: f32[1,5], index: 4, kind: input, shape index: {}]
  %s5 = inlined_call_operand.hbm [shape: f32[2,5], index: 5, kind: output, shape index: {}]
  %s6 = sld [smem:[#allocation0]]
  $region26: #{torch_rnn_forward.1} parent=0
    _
  %s8 = ssub.s32 1, %s6
  %s9 = scalar_select 0, %s8, %s6
  %s10 = sshll.u32 %s0, 4
  %s11 = int_to_ptr.vmem [resolvable:$true] %s10
  %13 = dma.vmem_to_smem %s11, 16, [#allocation3], [#allocation2]
  %14 = dma.done [#allocation2], 16
  %15 = sfence
  $region1: #{torch_rnn_forward.1} parent=0
    #allocation4 [shape = 'u8[1024]{0}', space=vmem, size = 0x400, scoped, tag = 'output window, operand 0, single buffered']
    #allocation5 [shape = 's32[1]{0}', space=sflag, size = 0x4, scoped, tag = 'scoped memory for torch_rnn_forward.1']
    %16 = vsyncpa [#allocation5], 0
    // Predicated region
    $region2: #{torch_rnn_forward.1} parent=1 // pred_check
      _
    $region3: #{torch_rnn_forward.1} parent=1 // pred_check_branch
      %18 = sbr.rel (0) target = $region5
    $region4: #{torch_rnn_forward.1} parent=1 // pred_region
      _
    $region5: #{torch_rnn_forward.1} parent=1 // pred_fallthru
      _
    // Predicated region
    $region6: #{torch_rnn_forward.1} parent=1 // pred_check
      _
    $region7: #{torch_rnn_forward.1} parent=1 // pred_check_branch
      %20 = sbr.rel (0) target = $region9
    $region8: #{torch_rnn_forward.1} parent=1 // pred_region
      _
    $region9: #{torch_rnn_forward.1} parent=1 // pred_fallthru
      _
    // Predicated region
    $region10: #{torch_rnn_forward.1} parent=1 // pred_check
      _
    $region11: #{torch_rnn_forward.1} parent=1 // pred_check_branch
      %22 = sbr.rel (0) target = $region13
    $region12: #{torch_rnn_forward.1} parent=1 // pred_region
      _
    $region13: #{torch_rnn_forward.1} parent=1 // pred_fallthru
      _
    // Predicated region
    $region14: #{torch_rnn_forward.1} parent=1 // pred_check
      _
    $region15: #{torch_rnn_forward.1} parent=1 // pred_check_branch
      %24 = sbr.rel (0) target = $region17
    $region16: #{torch_rnn_forward.1} parent=1 // pred_region
      _
    $region17: #{torch_rnn_forward.1} parent=1 // pred_fallthru
      _
    %v25 = vld [vmem:[%s2] sm:$0xf]
    %v26 = vld [vmem:[%s3] sm:$0xf]
    %v27 = vld [vmem:[%s4] sm:$0x1]
    %s28 = sld [smem:[#allocation3]]
    %s29 = scalar_lea.vmem %s1, %s28
    %v30 = vld [vmem:[%s29] sm:$0x1]
    %v31 = vtanh.pop %v30
    %s32 = sld [smem:[#allocation3 + $0x1]]
    %s33 = scalar_lea.vmem %s1, %s32
    %v34 = vld [vmem:[%s33] sm:$0x1]
    %36 = vset.pattern.permute.xlu0 0
    %37 = vperm.xlu0 %36, %v31
    %v38 = vpop.permute.xlu0 %37
    %v40 = vmul.f32 %v38, %v25
    %v41 = vadd.f32 %v34, %v40
    %42 = vset.pattern.permute.xlu0 1
    %43 = vperm.xlu0 %42, %v31
    %v44 = vpop.permute.xlu0 %43
    %v47 = vrot.slane %v25, 1
    %v49 = vmul.f32 %v44, %v47
    %v50 = vadd.f32 %v41, %v49
    %51 = vset.pattern.permute.xlu0 2
    %52 = vperm.xlu0 %51, %v31
    %v53 = vpop.permute.xlu0 %52
    %v55 = vrot.slane %v25, 2
    %v57 = vmul.f32 %v53, %v55
    %v58 = vadd.f32 %v50, %v57
    %59 = vset.pattern.permute.xlu0 3
    %60 = vperm.xlu0 %59, %v31
    %v61 = vpop.permute.xlu0 %60
    %v63 = vrot.slane %v25, 3
    %v65 = vmul.f32 %v61, %v63
    %v66 = vadd.f32 %v58, %v65
    %v67 = vtanh.pop %v66
    %s68 = sld [smem:[#allocation3 + $0x2]]
    %s69 = scalar_lea.vmem %s1, %s68
    %v70 = vld [vmem:[%s69] sm:$0x1]
    %72 = vset.pattern.permute.xlu0 0
    %73 = vperm.xlu0 %72, %v67
    %v74 = vpop.permute.xlu0 %73
    %v76 = vmul.f32 %v74, %v25
    %v77 = vadd.f32 %v70, %v76
    %78 = vset.pattern.permute.xlu0 1
    %79 = vperm.xlu0 %78, %v67
    %v80 = vpop.permute.xlu0 %79
    %v82 = vmul.f32 %v80, %v47
    %v83 = vadd.f32 %v77, %v82
    %84 = vset.pattern.permute.xlu0 2
    %85 = vperm.xlu0 %84, %v67
    %v86 = vpop.permute.xlu0 %85
    %v88 = vmul.f32 %v86, %v55
    %v89 = vadd.f32 %v83, %v88
    %90 = vset.pattern.permute.xlu0 3
    %91 = vperm.xlu0 %90, %v67
    %v92 = vpop.permute.xlu0 %91
    %v94 = vmul.f32 %v92, %v63
    %v95 = vadd.f32 %v89, %v94
    %v96 = vtanh.pop %v95
    %s97 = sld [smem:[#allocation3 + $0x3]]
    %s98 = scalar_lea.vmem %s1, %s97
    %v99 = vld [vmem:[%s98] sm:$0x1]
    %101 = vset.pattern.permute.xlu0 0
    %102 = vperm.xlu0 %101, %v96
    %v103 = vpop.permute.xlu0 %102
    %v105 = vmul.f32 %v103, %v25
    %v106 = vadd.f32 %v99, %v105
    %107 = vset.pattern.permute.xlu0 1
    %108 = vperm.xlu0 %107, %v96
    %v109 = vpop.permute.xlu0 %108
    %v111 = vmul.f32 %v109, %v47
    %v112 = vadd.f32 %v106, %v111
    %113 = vset.pattern.permute.xlu0 2
    %114 = vperm.xlu0 %113, %v96
    %v115 = vpop.permute.xlu0 %114
    %v117 = vmul.f32 %v115, %v55
    %v118 = vadd.f32 %v112, %v117
    %119 = vset.pattern.permute.xlu0 3
    %120 = vperm.xlu0 %119, %v96
    %v121 = vpop.permute.xlu0 %120
    %v123 = vmul.f32 %v121, %v63
    %v124 = vadd.f32 %v118, %v123
    %v125 = vtanh.pop %v124
    %s126 = sld [smem:[#allocation3 + $0x4]]
    %s127 = scalar_lea.vmem %s1, %s126
    %v128 = vld [vmem:[%s127] sm:$0x1]
    %130 = vset.pattern.permute.xlu0 0
    %131 = vperm.xlu0 %130, %v125
    %v132 = vpop.permute.xlu0 %131
    %v134 = vmul.f32 %v132, %v25
    %v135 = vadd.f32 %v128, %v134
    %136 = vset.pattern.permute.xlu0 1
    %137 = vperm.xlu0 %136, %v125
    %v138 = vpop.permute.xlu0 %137
    %v140 = vmul.f32 %v138, %v47
    %v141 = vadd.f32 %v135, %v140
    %142 = vset.pattern.permute.xlu0 2
    %143 = vperm.xlu0 %142, %v125
    %v144 = vpop.permute.xlu0 %143
    %v146 = vmul.f32 %v144, %v55
    %v147 = vadd.f32 %v141, %v146
    %148 = vset.pattern.permute.xlu0 3
    %149 = vperm.xlu0 %148, %v125
    %v150 = vpop.permute.xlu0 %149
    %v152 = vmul.f32 %v150, %v63
    %v153 = vadd.f32 %v147, %v152
    %v154 = vtanh.pop %v153
    %156 = vset.pattern.permute.xlu0 0
    %157 = vperm.xlu0 %156, %v154
    %v158 = vpop.permute.xlu0 %157
    %v160 = vmul.f32 %v158, %v26
    %v161 = vadd.f32 %v27, %v160
    %162 = vset.pattern.permute.xlu0 1
    %163 = vperm.xlu0 %162, %v154
    %v164 = vpop.permute.xlu0 %163
    %v167 = vrot.slane %v26, 1
    %v169 = vmul.f32 %v164, %v167
    %v170 = vadd.f32 %v161, %v169
    %171 = vset.pattern.permute.xlu0 2
    %172 = vperm.xlu0 %171, %v154
    %v173 = vpop.permute.xlu0 %172
    %v175 = vrot.slane %v26, 2
    %v177 = vmul.f32 %v173, %v175
    %v178 = vadd.f32 %v170, %v177
    %179 = vset.pattern.permute.xlu0 3
    %180 = vperm.xlu0 %179, %v154
    %v181 = vpop.permute.xlu0 %180
    %v183 = vrot.slane %v26, 3
    %v185 = vmul.f32 %v181, %v183
    %v186 = vadd.f32 %v178, %v185
    %vm187 = vcmask 32768
    %188 = vst.msk [vmem:[#allocation4] sm:$0x1] %vm187, %v186
    %s189 = sld [smem:[#allocation3 + $0x5]]
    %s190 = scalar_lea.vmem %s1, %s189
    %v191 = vld [vmem:[%s190] sm:$0x1]
    %v192 = vtanh.pop %v191
    %s193 = sld [smem:[#allocation3 + $0x6]]
    %s194 = scalar_lea.vmem %s1, %s193
    %v195 = vld [vmem:[%s194] sm:$0x1]
    %197 = vset.pattern.permute.xlu0 0
    %198 = vperm.xlu0 %197, %v192
    %v199 = vpop.permute.xlu0 %198
    %v201 = vmul.f32 %v199, %v25
    %v202 = vadd.f32 %v195, %v201
    %203 = vset.pattern.permute.xlu0 1
    %204 = vperm.xlu0 %203, %v192
    %v205 = vpop.permute.xlu0 %204
    %v207 = vmul.f32 %v205, %v47
    %v208 = vadd.f32 %v202, %v207
    %209 = vset.pattern.permute.xlu0 2
    %210 = vperm.xlu0 %209, %v192
    %v211 = vpop.permute.xlu0 %210
    %v213 = vmul.f32 %v211, %v55
    %v214 = vadd.f32 %v208, %v213
    %215 = vset.pattern.permute.xlu0 3
    %216 = vperm.xlu0 %215, %v192
    %v217 = vpop.permute.xlu0 %216
    %v219 = vmul.f32 %v217, %v63
    %v220 = vadd.f32 %v214, %v219
    %v221 = vtanh.pop %v220
    %s222 = sld [smem:[#allocation3 + $0x7]]
    %s223 = scalar_lea.vmem %s1, %s222
    %v224 = vld [vmem:[%s223] sm:$0x1]
    %226 = vset.pattern.permute.xlu0 0
    %227 = vperm.xlu0 %226, %v221
    %v228 = vpop.permute.xlu0 %227
    %v230 = vmul.f32 %v228, %v25
    %v231 = vadd.f32 %v224, %v230
    %232 = vset.pattern.permute.xlu0 1
    %233 = vperm.xlu0 %232, %v221
    %v234 = vpop.permute.xlu0 %233
    %v236 = vmul.f32 %v234, %v47
    %v237 = vadd.f32 %v231, %v236
    %238 = vset.pattern.permute.xlu0 2
    %239 = vperm.xlu0 %238, %v221
    %v240 = vpop.permute.xlu0 %239
    %v242 = vmul.f32 %v240, %v55
    %v243 = vadd.f32 %v237, %v242
    %244 = vset.pattern.permute.xlu0 3
    %245 = vperm.xlu0 %244, %v221
    %v246 = vpop.permute.xlu0 %245
    %v248 = vmul.f32 %v246, %v63
    %v249 = vadd.f32 %v243, %v248
    %v250 = vtanh.pop %v249
    %s251 = sld [smem:[#allocation3 + $0x8]]
    %s252 = scalar_lea.vmem %s1, %s251
    %v253 = vld [vmem:[%s252] sm:$0x1]
    %255 = vset.pattern.permute.xlu0 0
    %256 = vperm.xlu0 %255, %v250
    %v257 = vpop.permute.xlu0 %256
    %v259 = vmul.f32 %v257, %v25
    %v260 = vadd.f32 %v253, %v259
    %261 = vset.pattern.permute.xlu0 1
    %262 = vperm.xlu0 %261, %v250
    %v263 = vpop.permute.xlu0 %262
    %v265 = vmul.f32 %v263, %v47
    %v266 = vadd.f32 %v260, %v265
    %267 = vset.pattern.permute.xlu0 2
    %268 = vperm.xlu0 %267, %v250
    %v269 = vpop.permute.xlu0 %268
    %v271 = vmul.f32 %v269, %v55
    %v272 = vadd.f32 %v266, %v271
    %273 = vset.pattern.permute.xlu0 3
    %274 = vperm.xlu0 %273, %v250
    %v275 = vpop.permute.xlu0 %274
    %v277 = vmul.f32 %v275, %v63
    %v278 = vadd.f32 %v272, %v277
    %v279 = vtanh.pop %v278
    %s280 = sld [smem:[#allocation3 + $0x9]]
    %s281 = scalar_lea.vmem %s1, %s280
    %v282 = vld [vmem:[%s281] sm:$0x1]
    %284 = vset.pattern.permute.xlu0 0
    %285 = vperm.xlu0 %284, %v279
    %v286 = vpop.permute.xlu0 %285
    %v288 = vmul.f32 %v286, %v25
    %v289 = vadd.f32 %v282, %v288
    %290 = vset.pattern.permute.xlu0 1
    %291 = vperm.xlu0 %290, %v279
    %v292 = vpop.permute.xlu0 %291
    %v294 = vmul.f32 %v292, %v47
    %v295 = vadd.f32 %v289, %v294
    %296 = vset.pattern.permute.xlu0 2
    %297 = vperm.xlu0 %296, %v279
    %v298 = vpop.permute.xlu0 %297
    %v300 = vmul.f32 %v298, %v55
    %v301 = vadd.f32 %v295, %v300
    %302 = vset.pattern.permute.xlu0 3
    %303 = vperm.xlu0 %302, %v279
    %v304 = vpop.permute.xlu0 %303
    %v306 = vmul.f32 %v304, %v63
    %v307 = vadd.f32 %v301, %v306
    %v308 = vtanh.pop %v307
    %310 = vset.pattern.permute.xlu0 0
    %311 = vperm.xlu0 %310, %v308
    %v312 = vpop.permute.xlu0 %311
    %v314 = vmul.f32 %v312, %v26
    %v315 = vadd.f32 %v27, %v314
    %316 = vset.pattern.permute.xlu0 1
    %317 = vperm.xlu0 %316, %v308
    %v318 = vpop.permute.xlu0 %317
    %v320 = vmul.f32 %v318, %v167
    %v321 = vadd.f32 %v315, %v320
    %322 = vset.pattern.permute.xlu0 2
    %323 = vperm.xlu0 %322, %v308
    %v324 = vpop.permute.xlu0 %323
    %v326 = vmul.f32 %v324, %v175
    %v327 = vadd.f32 %v321, %v326
    %328 = vset.pattern.permute.xlu0 3
    %329 = vperm.xlu0 %328, %v308
    %v330 = vpop.permute.xlu0 %329
    %v332 = vmul.f32 %v330, %v183
    %v333 = vadd.f32 %v327, %v332
    %334 = vst.msk [vmem:[#allocation4 + $0x1] sm:$0x1] %vm187, %v333
    // Predicated region
    $region18: #{torch_rnn_forward.1} parent=1 // pred_check
      _
    $region19: #{torch_rnn_forward.1} parent=1 // pred_check_branch
      %336 = sbr.rel (0) target = $region21
    $region20: #{torch_rnn_forward.1} parent=1 // pred_region
      %s338 = ssub.s32 32, 32
      %339 = vsyncadd [#allocation5], %s338
      %s341 = sshll.u32 [#allocation4], 4
      %s342 = int_to_ptr.vmem [resolvable:$true] %s341
      %344 = dma.vmem_to_hbm [thread:$0]  %s342, 32, %s5, [#allocation5]
    $region21: #{torch_rnn_forward.1} parent=1 // pred_fallthru
      _
    // Predicated region
    $region22: #{torch_rnn_forward.1} parent=1 // pred_check
      _
    $region23: #{torch_rnn_forward.1} parent=1 // pred_check_branch
      %346 = sbr.rel (0) target = $region25
    $region24: #{torch_rnn_forward.1} parent=1 // pred_region
      %347 = dma.done [#allocation5], 32
    $region25: #{torch_rnn_forward.1} parent=1 // pred_fallthru
      _
    %348 = vsyncpa [#allocation5], 1

</llo_original>
